<compile_context>
chip_gen: v6e
topology: v6e:2x2x1
jax: 0.10.0
libtpu: 0.0.40
codegen_flags: <defaults>
</compile_context>

<pallas_src>
import numpy as np
import jax
import jax.numpy as jnp
from jax.experimental import pallas as pl
from jax.experimental.pallas import tpu as pltpu

KSIZE = 7
STRIDE = 2
PAD = 3
BN_EPS = 1e-5
WINSIZE = float(KSIZE * KSIZE)


def _round_up(a, b):
    return (a + b - 1) // b * b


def _pick_tile_m(M, target):
    """Row tile for pass 1: multiple of 16 (bf16 sublane packing), <= target,
    ~>= 4 grid steps when there is enough work (keeps a v7x megacore and the DMA
    pipeline busy), and preferably an exact divisor of M so the big patch matrix
    never needs a padded (extra HBM copy) round trip."""
    t = max(16, min(int(target), int(M)))
    t -= t % 16
    t = max(t, 16)
    # aim for >= ~4 grid steps
    t = min(t, max(16, _round_up(-(-M // 4), 16)))
    # prefer an exact divisor of M (no padding copy of the patch matrix)
    for cand in range(t, max(t // 2, 15), -16):
        if M % cand == 0:
            return cand
    return t


# ----------------------------------------------------------------------------
# Pass 1: tiled conv-as-matmul + partial-conv renorm + per-tile BN statistics
# ----------------------------------------------------------------------------
def _conv_stats_kernel(xp_ref, w_ref, ratio_ref, y_ref, stats_ref):
    # xp_ref    : (tile_m, K)     bf16 masked im2col patch rows
    # w_ref     : (K, Cout)       bf16 weights
    # ratio_ref : (tile_m, 1)     f32  partial-conv renorm (0 where window invalid / row padded)
    # y_ref     : (tile_m, Cout)  bf16 pre-BN activation (consumed by pass 2)
    # stats_ref : (1, 1, 2*Cout)  f32  lane-dense per-tile [sum | sum-of-squares]
    acc = jnp.dot(xp_ref[...], w_ref[...], preferred_element_type=jnp.float32)  # MXU, f32 acc
    out = acc * ratio_ref[...]                                                  # renormalization
    y_ref[...] = out.astype(y_ref.dtype)

    s = jnp.sum(out, axis=0, keepdims=True)            # (1, Cout)
    ss = jnp.sum(out * out, axis=0, keepdims=True)     # (1, Cout)
    stats_ref[0] = jnp.concatenate([s, ss], axis=-1)   # unmasked 128-lane store


# ----------------------------------------------------------------------------
# Pass 2: fused BN-apply + ReLU + separable MaxPool2d(3, stride=2, padding=1), NHWC
# ----------------------------------------------------------------------------
def _bn_relu_pool_kernel(y_ref, scale_ref, shift_ref, o_ref, pad_ref, tmp_ref):
    # y_ref     : (1, OH, OW, C)  bf16 pre-BN activation for one image
    # scale_ref : (1, C)  = gamma / sqrt(var + eps)
    # shift_ref : (1, C)  = beta - mean * scale
    # o_ref     : (1, PH, PW, C)  bf16 pooled output
    # pad_ref   : (OH+2, OW+2, C) f32 scratch; zero border (exact for post-ReLU values)
    # tmp_ref   : (OH+2, PW, C)   f32 scratch; W-direction pooled (separable max-pool)
    OHp2, OWp2, _ = pad_ref.shape
    OH, OW = OHp2 - 2, OWp2 - 2
    _, PH, PW, _ = o_ref.shape

    # Scratch persists across grid steps and the interior is fully overwritten per image,
    # so the zero border only needs to be written once (grid axis is "arbitrary").
    @pl.when(pl.program_id(0) == 0)
    def _():
        pad_ref[...] = jnp.zeros_like(pad_ref)

    a = jnp.maximum(
        y_ref[0].astype(jnp.float32) * scale_ref[...] + shift_ref[...], 0.0)
    pad_ref[1:OH + 1, 1:OW + 1, :] = a

    # Separable 3x3/s2 max-pool: 3-tap stride-2 max along W, then 3-tap stride-2 max along H
    # (3 + 3 strided slices instead of 9).  Border rows of tmp come out as max(0,0,0)=0.
    tmp_ref[...] = jnp.maximum(
        jnp.maximum(pad_ref[:, pl.ds(0, PW, 2), :], pad_ref[:, pl.ds(1, PW, 2), :]),
        pad_ref[:, pl.ds(2, PW, 2), :])
    o_ref[0] = jnp.maximum(
        jnp.maximum(tmp_ref[pl.ds(0, PH, 2), :, :], tmp_ref[pl.ds(1, PH, 2), :, :]),
        tmp_ref[pl.ds(2, PH, 2), :, :]).astype(o_ref.dtype)


# ----------------------------------------------------------------------------
# Forward wrapper
# ----------------------------------------------------------------------------
def cbrm_forward(x_nchw, mask_nchw, w_oihw, gamma, beta, *, tile_m=8192):
    N, Cin, H, W = x_nchw.shape
    Cout = w_oihw.shape[0]
    x_nchw = x_nchw.astype(jnp.float32)
    mask_nchw = mask_nchw.astype(jnp.float32)

    OH = (H + 2 * PAD - KSIZE) // STRIDE + 1
    OW = (W + 2 * PAD - KSIZE) // STRIDE + 1
    PH = (OH + 2 - 3) // 2 + 1
    PW = (OW + 2 - 3) // 2 + 1
    M = N * OH * OW
    K = Cin * KSIZE * KSIZE

    # ---- mask path: cheap 7x7 box-sum (1-channel stream, kept in XLA) ---------------
    msum = jax.lax.reduce_window(
        mask_nchw, 0.0, jax.lax.add,
        (1, 1, KSIZE, KSIZE), (1, 1, STRIDE, STRIDE),
        ((0, 0), (0, 0), (PAD, PAD), (PAD, PAD)))                     # (N,1,OH,OW)
    valid = msum > 0.0
    ratio = jnp.where(valid, WINSIZE / jnp.maximum(msum, 1.0), 0.0)
    ratio_rows = ratio.transpose(0, 2, 3, 1).reshape(M, 1).astype(jnp.float32)
    new_mask = valid.astype(jnp.float32)                              # (N,1,OH,OW)

    # ---- im2col patches: a single XLA op, emitted directly in NHWC, bf16 -----------
    xm = (x_nchw * mask_nchw).astype(jnp.bfloat16)
    patches = jax.lax.conv_general_dilated_patches(
        xm, (KSIZE, KSIZE), (STRIDE, STRIDE),
        ((PAD, PAD), (PAD, PAD)),
        dimension_numbers=('NCHW', 'OIHW', 'NHWC'))                   # (N,OH,OW,K), (c,kh,kw) order
    patches = patches.reshape(M, K)                                   # row-major view
    w_mat = w_oihw.reshape(Cout, K).T.astype(jnp.bfloat16)            # (K, Cout)

    # row tiling; zero-padded rows (zero patches x zero ratio) contribute nothing to
    # the output or the BN statistics
    tile_m = _pick_tile_m(M, tile_m)
    M_pad = _round_up(M, tile_m)
    if M_pad != M:
        patches = jnp.pad(patches, ((0, M_pad - M), (0, 0)))
        ratio_rows = jnp.pad(ratio_rows, ((0, M_pad - M), (0, 0)))
    n_tiles = M_pad // tile_m

    cparams1 = pltpu.CompilerParams(
        dimension_semantics=("parallel",),
        vmem_limit_bytes=48 * 1024 * 1024,   # <= v7x physical VMEM; v5e/v6e could go higher
    )

    y1, stats = pl.pallas_call(
        _conv_stats_kernel,
        out_shape=(jax.ShapeDtypeStruct((M_pad, Cout), jnp.bfloat16),
                   jax.ShapeDtypeStruct((n_tiles, 1, 2 * Cout), jnp.float32)),
        grid=(n_tiles,),
        in_specs=[pl.BlockSpec((tile_m, K), lambda i: (i, 0)),
                  pl.BlockSpec((K, Cout), lambda i: (0, 0)),
                  pl.BlockSpec((tile_m, 1), lambda i: (i, 0))],
        out_specs=(pl.BlockSpec((tile_m, Cout), lambda i: (i, 0)),
                   pl.BlockSpec((1, 1, 2 * Cout), lambda i: (i, 0, 0))),
        compiler_params=cparams1,
    )(patches, w_mat, ratio_rows)

    # ---- global BatchNorm2d statistics (training-mode forward), reduced in f32 -----
    ssum = jnp.sum(stats[:, 0, :], axis=0)                            # (2*Cout,)
    mean = ssum[:Cout] / float(M)
    var = jnp.maximum(ssum[Cout:] / float(M) - mean * mean, 0.0)
    scale = (gamma.astype(jnp.float32) * jax.lax.rsqrt(var + BN_EPS)).reshape(1, Cout)
    shift = (beta.astype(jnp.float32) - mean * scale[0]).reshape(1, Cout)

    y1_img = y1[:M].reshape(N, OH, OW, Cout)                          # NHWC, bf16

    # ---- pass 2: fused BN-apply + ReLU + separable max-pool (one image / grid step) --
    cparams2 = pltpu.CompilerParams(
        dimension_semantics=("arbitrary",),  # sequential: persistent zero border in scratch
        vmem_limit_bytes=48 * 1024 * 1024,
    )
    y_pool = pl.pallas_call(
        _bn_relu_pool_kernel,
        out_shape=jax.ShapeDtypeStruct((N, PH, PW, Cout), jnp.bfloat16),
        grid=(N,),
        in_specs=[pl.BlockSpec((1, OH, OW, Cout), lambda n: (n, 0, 0, 0)),
                  pl.BlockSpec((1, Cout), lambda n: (0, 0)),
                  pl.BlockSpec((1, Cout), lambda n: (0, 0))],
        out_specs=pl.BlockSpec((1, PH, PW, Cout), lambda n: (n, 0, 0, 0)),
        scratch_shapes=[pltpu.VMEM((OH + 2, OW + 2, Cout), jnp.float32),
                        pltpu.VMEM((OH + 2, PW, Cout), jnp.float32)],
        compiler_params=cparams2,
    )(y1_img, scale, shift)

    # mask max-pool: 1-channel stream, kept in XLA (a 1-lane Pallas stream is the
    # worst-case masked-store pattern).
    m_pool = jax.lax.reduce_window(
        new_mask, -jnp.inf, jax.lax.max,
        (1, 1, 3, 3), (1, 1, 2, 2), ((0, 0), (0, 0), (1, 1), (1, 1)))

    # bf16 transpose (half the relayout traffic), upcast once to match the module dtype
    y_out = y_pool.transpose(0, 3, 1, 2).astype(jnp.float32)          # NCHW
    return y_out, {'mask': m_pool}


# ----------------------------------------------------------------------------
# Pure-JAX reference (validation only; same bf16 input quantization as the kernel)
# ----------------------------------------------------------------------------
def cbrm_reference(x, mask, w, gamma, beta):
    dn = ('NCHW', 'OIHW', 'NCHW')
    xm = (x * mask).astype(jnp.bfloat16)
    y = jax.lax.conv_general_dilated(xm, w.astype(jnp.bfloat16),
                                     (STRIDE, STRIDE), ((PAD, PAD), (PAD, PAD)),
                                     dimension_numbers=dn,
                                     preferred_element_type=jnp.float32)
    ones_k = jnp.ones((1, 1, KSIZE, KSIZE), jnp.float32)
    msum = jax.lax.conv_general_dilated(mask, ones_k, (STRIDE, STRIDE),
                                        ((PAD, PAD), (PAD, PAD)),
                                        dimension_numbers=dn)
    valid = msum > 0
    ratio = jnp.where(valid, WINSIZE / jnp.maximum(msum, 1.0), 0.0)
    y = y * ratio
    new_mask = valid.astype(jnp.float32)
    mu = jnp.mean(y, axis=(0, 2, 3), keepdims=True)
    var = jnp.mean((y - mu) ** 2, axis=(0, 2, 3), keepdims=True)
    y = (y - mu) * jax.lax.rsqrt(var + BN_EPS)
    y = y * gamma.reshape(1, -1, 1, 1) + beta.reshape(1, -1, 1, 1)
    y = jnp.maximum(y, 0.0)

    def mp(a):
        return jax.lax.reduce_window(a, -jnp.inf, jax.lax.max,
                                     (1, 1, 3, 3), (1, 1, 2, 2),
                                     ((0, 0), (0, 0), (1, 1), (1, 1)))
    return mp(y), mp(new_mask)


if __name__ == "__main__":
    key = jax.random.PRNGKey(0)
    kx, km, kw = jax.random.split(key, 3)

    N, Cin, H, W = 2, 3, 16, 16
    Cout = 64

    x = jax.random.normal(kx, (N, Cin, H, W), jnp.float32)
    mask = (jax.random.uniform(km, (N, 1, H, W)) > 0.3).astype(jnp.float32)

    # Conv weight [64,3,7,7] (no bias); BatchNorm2d defaults: weight=1, bias=0.
    w = jax.random.normal(kw, (Cout, Cin, KSIZE, KSIZE), jnp.float32) * 0.05
    gamma = jnp.ones((Cout,), jnp.float32)
    beta = jnp.zeros((Cout,), jnp.float32)

    # small tile so the tiny test exercises multi-tile BN-statistics aggregation
    y, aux = cbrm_forward(x, mask, w, gamma, beta, tile_m=64)
    y = jax.block_until_ready(y)
    m = jax.block_until_ready(aux['mask'])

    assert y.shape == (N, Cout, 4, 4), y.shape
    assert m.shape == (N, 1, 4, 4), m.shape

    y_ref, m_ref = cbrm_reference(x, mask, w, gamma, beta)
    np.testing.assert_allclose(np.asarray(y), np.asarray(y_ref), rtol=2e-2, atol=2e-2)
    np.testing.assert_allclose(np.asarray(m), np.asarray(m_ref), rtol=0, atol=1e-6)

    print("KERNEL_OK")
</pallas_src>

<mosaic_0001>
module attributes {stable_mosaic.version = 11 : i64} {
  func.func @_conv_stats_kernel(%arg0: i32, %arg1: memref<32x147xbf16, #tpu.memory_space<vmem>>, %arg2: memref<147x64xbf16, #tpu.memory_space<vmem>>, %arg3: memref<32x1xf32, #tpu.memory_space<vmem>>, %arg4: memref<32x64xbf16, #tpu.memory_space<vmem>>, %arg5: memref<1x1x128xf32, #tpu.memory_space<vmem>>) attributes {dimension_semantics = [#tpu.dimension_semantics<parallel>], iteration_bounds = array<i64: 4>, scalar_prefetch = 0 : i64, scratch_operands = 0 : i64, tpu.core_type = #tpu.core_type<tc>, window_params = [{transform_indices = @transform_0, window_bounds = array<i64: 32, 147>}, {pipeline_mode = #tpu.pipeline_mode<synchronous>, transform_indices = @transform_1, window_bounds = array<i64: 147, 64>}, {transform_indices = @transform_2, window_bounds = array<i64: 32, 1>}, {transform_indices = @transform_3, window_bounds = array<i64: 32, 64>}, {transform_indices = @transform_4, window_bounds = array<i64: 1, 1, 128>}]} {
    %c0 = arith.constant 0 : index
    %c0_0 = arith.constant 0 : index
    %0 = vector.load %arg1[%c0, %c0_0] : memref<32x147xbf16, #tpu.memory_space<vmem>>, vector<32x147xbf16>
    %c0_1 = arith.constant 0 : index
    %c0_2 = arith.constant 0 : index
    %1 = vector.load %arg2[%c0_1, %c0_2] : memref<147x64xbf16, #tpu.memory_space<vmem>>, vector<147x64xbf16>
    %cst = arith.constant dense<0.000000e+00> : vector<32x64xf32>
    %2 = tpu.matmul %0, %1, %cst {dimension_numbers = #tpu.dot_dimension_numbers<[1], [0], [0], [1], [0, 0, 1, 1], [], []>} : vector<32x147xbf16>, vector<147x64xbf16>, vector<32x64xf32> -> vector<32x64xf32>
    %c0_3 = arith.constant 0 : index
    %c0_4 = arith.constant 0 : index
    %3 = vector.load %arg3[%c0_3, %c0_4] : memref<32x1xf32, #tpu.memory_space<vmem>>, vector<32x1xf32>
    %4 = vector.broadcast %3 : vector<32x1xf32> to vector<32x64xf32>
    %5 = arith.mulf %2, %4 : vector<32x64xf32>
    %6 = arith.truncf %5 : vector<32x64xf32> to vector<32x64xbf16>
    %c0_5 = arith.constant 0 : index
    %c0_6 = arith.constant 0 : index
    %7 = vector.load %arg4[%c0_5, %c0_6] : memref<32x64xbf16, #tpu.memory_space<vmem>>, vector<32x64xbf16>
    tpu.vector_store %arg4[%c0_5, %c0_6], %6 {strides = array<i32>} : memref<32x64xbf16, #tpu.memory_space<vmem>>, vector<32x64xbf16>,
    %cst_7 = arith.constant dense<0.000000e+00> : vector<64xf32>
    %8 = vector.multi_reduction <add>, %5, %cst_7 [0] : vector<32x64xf32> to vector<64xf32>
    %9 = vector.shape_cast %8 : vector<64xf32> to vector<1x64xf32>
    %10 = arith.mulf %5, %5 : vector<32x64xf32>
    %cst_8 = arith.constant dense<0.000000e+00> : vector<64xf32>
    %11 = vector.multi_reduction <add>, %10, %cst_8 [0] : vector<32x64xf32> to vector<64xf32>
    %12 = vector.shape_cast %11 : vector<64xf32> to vector<1x64xf32>
    %13 = tpu.concatenate %9, %12 in 1 : vector<1x64xf32>, vector<1x64xf32> -> vector<1x128xf32>
    %c0_9 = arith.constant 0 : index
    %c0_10 = arith.constant 0 : index
    %c0_11 = arith.constant 0 : index
    %14 = vector.load %arg5[%c0_9, %c0_10, %c0_11] : memref<1x1x128xf32, #tpu.memory_space<vmem>>, vector<1x1x128xf32>
    %15 = vector.shape_cast %14 : vector<1x1x128xf32> to vector<1x128xf32>
    %16 = vector.shape_cast %13 : vector<1x128xf32> to vector<1x1x128xf32>
    tpu.vector_store %arg5[%c0_9, %c0_10, %c0_11], %16 {strides = array<i32>} : memref<1x1x128xf32, #tpu.memory_space<vmem>>, vector<1x1x128xf32>,
    return
  }
  func.func @transform_0(%arg0: i32) -> (i32, i32) {
    %c0_i32 = arith.constant 0 : i32
    %c0_i32_0 = arith.constant 0 : i32
    return %arg0, %c0_i32 : i32, i32
  }
  func.func @transform_1(%arg0: i32) -> (i32, i32) {
    %c0_i32 = arith.constant 0 : i32
    %c0_i32_0 = arith.constant 0 : i32
    %c0_i32_1 = arith.constant 0 : i32
    return %c0_i32, %c0_i32_0 : i32, i32
  }
  func.func @transform_2(%arg0: i32) -> (i32, i32) {
    %c0_i32 = arith.constant 0 : i32
    %c0_i32_0 = arith.constant 0 : i32
    return %arg0, %c0_i32 : i32, i32
  }
  func.func @transform_3(%arg0: i32) -> (i32, i32) {
    %c0_i32 = arith.constant 0 : i32
    %c0_i32_0 = arith.constant 0 : i32
    return %arg0, %c0_i32 : i32, i32
  }
  func.func @transform_4(%arg0: i32) -> (i32, i32, i32) {
    %c0_i32 = arith.constant 0 : i32
    %c0_i32_0 = arith.constant 0 : i32
    %c0_i32_1 = arith.constant 0 : i32
    return %arg0, %c0_i32, %c0_i32_0 : i32, i32, i32
  }
}

</mosaic_0001>

<llo_original>
// kernel: tpu_custom_call.1
$region0: #{tpu_custom_call.1}
  #allocation0 [shape = 'u32[]', space=smem, size = 0x4, offset = 0x4, fixed_abs, tag = 'smem constant byte address 0x4 - core index']
  #allocation1 [shape = 'u32[144,128]{1,0:T(1,128)}', space=vmem, size = 0x12000, scoped, tag = 'internal scratch']
  %s0 = inlined_call_operand.vmem [shape: bf16[128,147], index: 0, kind: input, shape index: {}]
  %s1 = inlined_call_operand.vmem [shape: bf16[147,64], index: 1, kind: input, shape index: {}]
  %s2 = inlined_call_operand.vmem [shape: f32[128,1], index: 2, kind: input, shape index: {}]
  %s3 = inlined_call_operand.vmem [shape: bf16[128,64], index: 3, kind: output, shape index: {0}]
  %s4 = inlined_call_operand.hbm [shape: f32[4,1,128], index: 4, kind: output, shape index: {1}]
  %5 = xla_tuple %s3, %s4
  %s6 = sld [smem:[#allocation0]]
  $region53: #{tpu_custom_call.1} parent=0
    _
  %s8 = ssub.s32 1, %s6
  %s9 = scalar_select 0, %s8, %s6
  $region1: #{tpu_custom_call.1} parent=0
    #allocation2 [shape = 'u8[1024]{0}', space=vmem, size = 0x400, scoped, tag = 'output window, operand 1']
    #allocation3 [shape = 's32[2]{0}', space=sflag, size = 0x8, scoped, tag = 'scoped memory for tpu_custom_call.1']
    %10 = vsyncpa [#allocation3], 0
    %s11 = scalar_lea.sflag [#allocation3], 1
    %12 = vsyncpa %s11, 0
    loop: start=0, step=1, limit=6
    $region2: #{tpu_custom_call.1} parent=1 // loop_pre_header
      _
    $region3: #{tpu_custom_call.1} parent=1 // loop_header
      %s14 = sphi 0, %s18
      %p15 = scmp.ge.s32.totalorder %s14, 6
      %s24 = sphi 0, %s26
      %s27 = sphi 0, %s24
      %s28 = sphi 0, %s27
      %s44 = sphi 0, %s28
      %s48 = sphi 0, %s48
      %s50 = sphi 0, %s48
      %s51 = sphi 0, %s50
      %s65 = sphi 0, %s51
      %s71 = sphi 0, %s73
      %s74 = sphi 0, %s71
      %s75 = sphi 0, %s74
      %s91 = sphi 0, %s75
      %s97 = sphi 0, %s99
      %s100 = sphi 0, %s97
      %s101 = sphi 0, %s100
      %s117 = sphi 0, %s101
      %s123 = sphi 0, %s125
      %s126 = sphi 0, %s123
      %s127 = sphi 0, %s126
      %s143 = sphi 0, %s127
    $region4: #{tpu_custom_call.1} parent=1 // loop_header_branch
      %17 = sbr.rel (%p15) target = $region8
    $region5: #{tpu_custom_call.1} parent=1 // loop_body
      %s19 = ssub.s32 %s14, 1
      %s20 = ssub.s32 %s14, 2
      %s21 = sadd.s32 %s14, 1
      %s22 = ssub.s32 %s14, %s21
      %p23 = scmp.eq.s32.totalorder %s22, 0
      %s25 = sadd.s32 %s24, 1
      %s26 = scalar_select %p23, %s24, %s25
      %p29 = pneg %p23
      %p30 = scmp.eq.s32.totalorder %s14, 3
      %p31 = por %p29, %p30
      %p32 = scmp.ne.s32.totalorder %s24, %s27
      %p33 = scmp.eq.s32.totalorder %s14, 0
      %p34 = por %p32, %p33
      %p35 = scmp.ne.s32.totalorder %s24, %s27
      %p36 = scmp.eq.s32.totalorder %s19, 3
      %p37 = por %p35, %p36
      %p38 = scmp.ne.s32.totalorder %s27, %s28
      %p39 = scmp.eq.s32.totalorder %s19, 0
      %p40 = por %p38, %p39
      %p41 = scmp.ne.s32.totalorder %s27, %s28
      %p42 = scmp.eq.s32.totalorder %s20, 3
      %p43 = por %p41, %p42
      %p45 = scmp.ne.s32.totalorder %s28, %s44
      %p46 = scmp.eq.s32.totalorder %s20, 0
      %p47 = por %p45, %p46
      %s49 = sadd.s32 %s48, 1
      %p52 = scmp.eq.s32.totalorder %s14, 3
      %p53 = scmp.ne.s32.totalorder %s48, %s50
      %p54 = scmp.eq.s32.totalorder %s14, 0
      %p55 = por %p53, %p54
      %p56 = scmp.ne.s32.totalorder %s48, %s50
      %p57 = scmp.eq.s32.totalorder %s19, 3
      %p58 = por %p56, %p57
      %p59 = scmp.ne.s32.totalorder %s50, %s51
      %p60 = scmp.eq.s32.totalorder %s19, 0
      %p61 = por %p59, %p60
      %p62 = scmp.ne.s32.totalorder %s50, %s51
      %p63 = scmp.eq.s32.totalorder %s20, 3
      %p64 = por %p62, %p63
      %p66 = scmp.ne.s32.totalorder %s51, %s65
      %p67 = scmp.eq.s32.totalorder %s20, 0
      %p68 = por %p66, %p67
      %s69 = ssub.s32 %s14, %s21
      %p70 = scmp.eq.s32.totalorder %s69, 0
      %s72 = sadd.s32 %s71, 1
      %s73 = scalar_select %p70, %s71, %s72
      %p76 = pneg %p70
      %p77 = scmp.eq.s32.totalorder %s14, 3
      %p78 = por %p76, %p77
      %p79 = scmp.ne.s32.totalorder %s71, %s74
      %p80 = scmp.eq.s32.totalorder %s14, 0
      %p81 = por %p79, %p80
      %p82 = scmp.ne.s32.totalorder %s71, %s74
      %p83 = scmp.eq.s32.totalorder %s19, 3
      %p84 = por %p82, %p83
      %p85 = scmp.ne.s32.totalorder %s74, %s75
      %p86 = scmp.eq.s32.totalorder %s19, 0
      %p87 = por %p85, %p86
      %p88 = scmp.ne.s32.totalorder %s74, %s75
      %p89 = scmp.eq.s32.totalorder %s20, 3
      %p90 = por %p88, %p89
      %p92 = scmp.ne.s32.totalorder %s75, %s91
      %p93 = scmp.eq.s32.totalorder %s20, 0
      %p94 = por %p92, %p93
      %s95 = ssub.s32 %s14, %s21
      %p96 = scmp.eq.s32.totalorder %s95, 0
      %s98 = sadd.s32 %s97, 1
      %s99 = scalar_select %p96, %s97, %s98
      %p102 = pneg %p96
      %p103 = scmp.eq.s32.totalorder %s14, 3
      %p104 = por %p102, %p103
      %p105 = scmp.ne.s32.totalorder %s97, %s100
      %p106 = scmp.eq.s32.totalorder %s14, 0
      %p107 = por %p105, %p106
      %p108 = scmp.ne.s32.totalorder %s97, %s100
      %p109 = scmp.eq.s32.totalorder %s19, 3
      %p110 = por %p108, %p109
      %p111 = scmp.ne.s32.totalorder %s100, %s101
      %p112 = scmp.eq.s32.totalorder %s19, 0
      %p113 = por %p111, %p112
      %p114 = scmp.ne.s32.totalorder %s100, %s101
      %p115 = scmp.eq.s32.totalorder %s20, 3
      %p116 = por %p114, %p115
      %p118 = scmp.ne.s32.totalorder %s101, %s117
      %p119 = scmp.eq.s32.totalorder %s20, 0
      %p120 = por %p118, %p119
      %s121 = ssub.s32 %s14, %s21
      %p122 = scmp.eq.s32.totalorder %s121, 0
      %s124 = sadd.s32 %s123, 1
      %s125 = scalar_select %p122, %s123, %s124
      %p128 = pneg %p122
      %p129 = scmp.eq.s32.totalorder %s14, 3
      %p130 = por %p128, %p129
      %p131 = scmp.ne.s32.totalorder %s123, %s126
      %p132 = scmp.eq.s32.totalorder %s14, 0
      %p133 = por %p131, %p132
      %p134 = scmp.ne.s32.totalorder %s123, %s126
      %p135 = scmp.eq.s32.totalorder %s19, 3
      %p136 = por %p134, %p135
      %p137 = scmp.ne.s32.totalorder %s126, %s127
      %p138 = scmp.eq.s32.totalorder %s19, 0
      %p139 = por %p137, %p138
      %p140 = scmp.ne.s32.totalorder %s126, %s127
      %p141 = scmp.eq.s32.totalorder %s20, 3
      %p142 = por %p140, %p141
      %p144 = scmp.ne.s32.totalorder %s127, %s143
      %p145 = scmp.eq.s32.totalorder %s20, 0
      %p146 = por %p144, %p145
      %p147 = scmp.le.s32.totalorder 1, %s14
      %p148 = scmp.lt.s32.totalorder %s14, 5
      %p149 = pnand %p147, %p148
      %p150 = pneg %p149
      // Predicated region
      $region9: #{tpu_custom_call.1} parent=5 // pred_check
        _
      $region10: #{tpu_custom_call.1} parent=5 // pred_check_branch
        %152 = sbr.rel (%p149) target = $region12
      $region11: #{tpu_custom_call.1} parent=5 // pred_region
        %s153 = ssub.s32 %s14, 1
        // Predicated region
        $region13: #{tpu_custom_call.1} parent=11 // pred_check
          %p154 = pneg %p61
        $region14: #{tpu_custom_call.1} parent=11 // pred_check_branch
          %156 = sbr.rel (%p154) target = $region16
        $region15: #{tpu_custom_call.1} parent=11 // pred_region
          _
        $region16: #{tpu_custom_call.1} parent=11 // pred_fallthru
          _
      $region12: #{tpu_custom_call.1} parent=5 // pred_fallthru
        _
      %p157 = scmp.lt.s32.totalorder %s14, 4
      // Predicated region
      $region17: #{tpu_custom_call.1} parent=5 // pred_check
        %p158 = pneg %p157
      $region18: #{tpu_custom_call.1} parent=5 // pred_check_branch
        %160 = sbr.rel (%p158) target = $region20
      $region19: #{tpu_custom_call.1} parent=5 // pred_region
        // Predicated region
        $region21: #{tpu_custom_call.1} parent=19 // pred_check
          %p161 = pneg %p34
        $region22: #{tpu_custom_call.1} parent=19 // pred_check_branch
          %163 = sbr.rel (%p161) target = $region24
        $region23: #{tpu_custom_call.1} parent=19 // pred_region
          %s164 = smul.u32 4, %s14
          %p165 = scmp.lt.s32.totalorder %s164, 15
          %s166 = scalar_select %p165, %s164, 15
          %s167 = smul.addr %s166, 2
          %s168 = smul.addr %s167, 4
          %s169 = scalar_lea.vmem %s0, %s168
          %s170 = smul.u32 4, %s14
        $region24: #{tpu_custom_call.1} parent=19 // pred_fallthru
          _
        // Predicated region
        $region25: #{tpu_custom_call.1} parent=19 // pred_check
          %p171 = pneg %p81
        $region26: #{tpu_custom_call.1} parent=19 // pred_check_branch
          %173 = sbr.rel (%p171) target = $region28
        $region27: #{tpu_custom_call.1} parent=19 // pred_region
          %s174 = smul.u32 4, %s14
          %p175 = scmp.lt.s32.totalorder %s174, 15
          %s176 = scalar_select %p175, %s174, 15
          %s177 = smul.addr %s176, 8
          %s178 = scalar_lea.vmem %s2, %s177
          %s179 = smul.u32 4, %s14
        $region28: #{tpu_custom_call.1} parent=19 // pred_fallthru
          _
      $region20: #{tpu_custom_call.1} parent=5 // pred_fallthru
        _
      %p180 = scmp.le.s32.totalorder 1, %s14
      %p181 = scmp.lt.s32.totalorder %s14, 5
      %p182 = pnand %p180, %p181
      %p183 = pneg %p182
      // Predicated region
      $region29: #{tpu_custom_call.1} parent=5 // pred_check
        _
      $region30: #{tpu_custom_call.1} parent=5 // pred_check_branch
        %185 = sbr.rel (%p182) target = $region32
      $region31: #{tpu_custom_call.1} parent=5 // pred_region
        %s186 = ssub.s32 %s14, 1
        %s187 = smul.u32 4, %s19
        %p188 = scmp.lt.s32.totalorder %s187, 15
        %s189 = scalar_select %p188, %s187, 15
        %s190 = smul.addr %s189, 2
        %s191 = smul.addr %s190, 4
        %s192 = scalar_lea.vmem %s0, %s191
        %p193 = pneg %p40
        %p194 = pneg %p37
        %p195 = pneg %p61
        %p196 = pneg %p58
        %s197 = smul.u32 4, %s19
        %p198 = scmp.lt.s32.totalorder %s197, 15
        %s199 = scalar_select %p198, %s197, 15
        %s200 = smul.addr %s199, 8
        %s201 = scalar_lea.vmem %s2, %s200
        %p202 = pneg %p87
        %p203 = pneg %p84
        %p204 = pneg %p113
        %p205 = pneg %p110
        %s206 = smul.u32 4, %s19
        %p207 = scmp.lt.s32.totalorder %s206, 15
        %s208 = scalar_select %p207, %s206, 15
        %s209 = smul.addr %s208, 4
        %s210 = scalar_lea.vmem %s3, %s209
        %p211 = pneg %p139
        %p212 = pneg %p136
        %s213 = sand.u32 %s126, 1
        %s214 = scalar_lea.sflag [#allocation3], %s213
        %s215 = sand.u32 %s126, 1
        %s216 = scalar_lea.vmem [#allocation2], %s215
        %s217 = smul.u32 4, %s19
        %p218 = scmp.lt.s32.totalorder %s217, 15
        %s219 = scalar_select %p218, %s217, 15
        %s220 = smul.addr %s219, 2
        %s221 = smul.addr %s220, 4
        %s222 = scalar_lea.vmem %s0, %s221
        %s223 = smul.u32 4, %s19
        %s224 = smul.u32 4, %s19
        %p225 = scmp.lt.s32.totalorder %s224, 15
        %s226 = scalar_select %p225, %s224, 15
        %s227 = smul.addr %s226, 8
        %s228 = scalar_lea.vmem %s2, %s227
        %s229 = smul.u32 4, %s19
        %s230 = smul.u32 4, %s19
        %p231 = scmp.lt.s32.totalorder %s230, 15
        %s232 = scalar_select %p231, %s230, 15
        %s233 = smul.addr %s232, 4
        %s234 = scalar_lea.vmem %s3, %s233
        %s235 = smul.u32 4, %s19
        %v237 = vld [vmem:[%s222] sm:$0xff]
        %v238 = vld [vmem:[%s222 + $0x8] sm:$0xff]
        %v239 = vld [vmem:[%s222 + $0x10] sm:$0xff]
        %v240 = vld [vmem:[%s222 + $0x18] sm:$0xff]
        %v241 = vld [vmem:[%s1] sm:$0xf]
        %v242 = vld [vmem:[%s1 + $0x4] sm:$0xf]
        %v243 = vld [vmem:[%s1 + $0x8] sm:$0xf]
        %v244 = vld [vmem:[%s1 + $0xc] sm:$0xf]
        %v245 = vld [vmem:[%s1 + $0x10] sm:$0xf]
        %v246 = vld [vmem:[%s1 + $0x14] sm:$0xf]
        %v247 = vld [vmem:[%s1 + $0x18] sm:$0xf]
        %v248 = vld [vmem:[%s1 + $0x1c] sm:$0xf]
        %v249 = vld [vmem:[%s1 + $0x20] sm:$0xf]
        %v250 = vld [vmem:[%s1 + $0x24] sm:$0xf]
        %v251 = vld [vmem:[%s1 + $0x28] sm:$0xf]
        %v252 = vld [vmem:[%s1 + $0x2c] sm:$0xf]
        %v253 = vld [vmem:[%s1 + $0x30] sm:$0xf]
        %v254 = vld [vmem:[%s1 + $0x34] sm:$0xf]
        %v255 = vld [vmem:[%s1 + $0x38] sm:$0xf]
        %v256 = vld [vmem:[%s1 + $0x3c] sm:$0xf]
        %v257 = vld [vmem:[%s1 + $0x40] sm:$0xf]
        %v258 = vld [vmem:[%s1 + $0x44] sm:$0xf]
        %v259 = vld [vmem:[%s1 + $0x48] sm:$0x3]
        %v264 = vunpack.c.l.b16 %v237
        %v265 = vunpack.c.h.b16 %v237
        %v266 = vunpack.c.l.b16 %v238
        %v267 = vunpack.c.h.b16 %v238
        %v268 = vunpack.c.l.b16 %v239
        %v269 = vunpack.c.h.b16 %v239
        %v270 = vunpack.c.l.b16 %v240
        %v271 = vunpack.c.h.b16 %v240
        %v272 = vpack.c.b16 %v266, %v264
        %v273 = vpack.c.b16 %v267, %v265
        %v274 = vpack.c.b16 %v270, %v268
        %v275 = vpack.c.b16 %v271, %v269
        %v297 = vunpack.c.l.b16 %v241
        %v298 = vunpack.c.l.b16 %v242
        %v299 = vunpack.c.l.b16 %v243
        %v300 = vunpack.c.l.b16 %v244
        %v301 = vunpack.c.l.b16 %v245
        %v302 = vunpack.c.l.b16 %v246
        %v303 = vunpack.c.l.b16 %v247
        %v304 = vunpack.c.l.b16 %v248
        %v305 = vunpack.c.l.b16 %v249
        %v306 = vunpack.c.l.b16 %v250
        %v307 = vunpack.c.l.b16 %v251
        %v308 = vunpack.c.l.b16 %v252
        %v309 = vunpack.c.l.b16 %v253
        %v310 = vunpack.c.l.b16 %v254
        %v311 = vunpack.c.l.b16 %v255
        %v312 = vunpack.c.l.b16 %v256
        %v313 = vunpack.c.l.b16 %v257
        %v314 = vunpack.c.l.b16 %v258
        %v315 = vunpack.c.l.b16 %v259
        %v316 = vpack.c.b16 %v298, %v297
        %v317 = vpack.c.b16 %v300, %v299
        %v318 = vpack.c.b16 %v302, %v301
        %v319 = vpack.c.b16 %v304, %v303
        %v320 = vpack.c.b16 %v306, %v305
        %v321 = vpack.c.b16 %v308, %v307
        %v322 = vpack.c.b16 %v310, %v309
        %v323 = vpack.c.b16 %v312, %v311
        %v324 = vpack.c.b16 %v314, %v313
        %v325 = vpack.c.b16 %v315, %v315
        %vm335 = vcmask 154624
        %v337 = vsel %vm335, %v273, 0
        %v340 = vsel %vm335, %v275, 0
        %vm342 = vcmask 1040384
        %vm343 = vcmask 1041408
        %v344 = vsel %vm342, 4294967295, 65535
        %v345 = vsel %vm343, %v344, 0
        %v347 = vand.u32 %v325, %v345
        %349 = vmatprep.subr.bf16.mxu0 0
        %350 = vmatpush1.bf16.msra.mxu0 %v323
        %351 = vmatprep.subr.bf16.mxu0 0
        %352 = vmatpush1.bf16.msra.mxu0 %v322
        %353 = vmatprep.subr.bf16.mxu0 0
        %354 = vmatpush1.bf16.msra.mxu0 %v321
        %355 = vmatprep.subr.bf16.mxu0 0
        %356 = vmatpush1.bf16.msra.mxu0 %v320
        %357 = vmatprep.subr.bf16.mxu0 0
        %358 = vmatpush1.bf16.msra.mxu0 %v319
        %359 = vmatprep.subr.bf16.mxu0 0
        %360 = vmatpush1.bf16.msra.mxu0 %v318
        %361 = vmatprep.subr.bf16.mxu0 0
        %362 = vmatpush1.bf16.msra.mxu0 %v317
        %363 = vmatprep.subr.bf16.mxu0 0
        %364 = vmatpush1.bf16.msra.mxu0 %v316
        %365 = vmatprep.subr.bf16.mxu0 0
        %366 = vmatpush2.bf16.msra.mxu0 0
        %367 = vmatprep.subr.bf16.mxu0 0
        %368 = vmatpush2.bf16.msra.mxu0 0
        %369 = vmatprep.subr.bf16.mxu0 0
        %370 = vmatpush2.bf16.msra.mxu0 0
        %371 = vmatprep.subr.bf16.mxu0 0
        %372 = vmatpush2.bf16.msra.mxu0 0
        %373 = vmatprep.subr.bf16.mxu0 0
        %374 = vmatpush2.bf16.msra.mxu0 0
        %375 = vmatprep.subr.bf16.mxu0 0
        %376 = vmatpush2.bf16.msra.mxu0 0
        %377 = vmatprep.subr.bf16.mxu0 0
        %378 = vmatpush2.bf16.msra.mxu0 %v347
        %379 = vmatprep.subr.bf16.mxu0 0
        %380 = vmatpush2.bf16.msra.mxu0 %v324
        %381 = vmatprep.mubr.bf16.mxu0 %v337
        %382 = vmatmul.mubr.bf16.gmra.mxu0 %v272
        %v383 = vpop.f32.mrf.mxu0
        %v384 = vadd.f32 0.0, %v383
        %v385 = vpop.f32.mrf.mxu0
        %v386 = vpop.f32.mrf.mxu0
        %v387 = vadd.f32 0.0, %v386
        %v388 = vpop.f32.mrf.mxu0
        %389 = vmatprep.mubr.bf16.mxu0 %v340
        %390 = vmatmul.mubr.bf16.gmra.mxu0 %v274
        %v391 = vpop.f32.mrf.mxu0
        %v392 = vadd.f32 0.0, %v391
        %v393 = vpop.f32.mrf.mxu0
        %v394 = vpop.f32.mrf.mxu0
        %v395 = vadd.f32 0.0, %v394
        %v396 = vpop.f32.mrf.mxu0
        %397 = vdwg.mxu0
        %v398 = vld [vmem:[%s228] sm:$0xff]
        %v399 = vld [vmem:[%s228 + $0x8] sm:$0xff]
        %v400 = vld [vmem:[%s228 + $0x10] sm:$0xff]
        %v401 = vld [vmem:[%s228 + $0x18] sm:$0xff]
        %403 = vset.pattern.permute.xlu0 0
        %404 = vperm.xlu0 %403, %v398
        %v405 = vpop.permute.xlu0 %404
        %408 = vset.pattern.permute.xlu0 0
        %409 = vperm.xlu0 %408, %v399
        %v410 = vpop.permute.xlu0 %409
        %413 = vset.pattern.permute.xlu0 0
        %414 = vperm.xlu0 %413, %v400
        %v415 = vpop.permute.xlu0 %414
        %418 = vset.pattern.permute.xlu0 0
        %419 = vperm.xlu0 %418, %v401
        %v420 = vpop.permute.xlu0 %419
        %v422 = vmul.f32 %v384, %v405
        %v423 = vmul.f32 %v387, %v410
        %v424 = vmul.f32 %v392, %v415
        %v425 = vmul.f32 %v395, %v420
        %v426 = vpack.c.bf16 %v423, %v422
        %v427 = vpack.c.bf16 %v425, %v424
        %v430 = vunpack.c.l.b16 %v426
        %v431 = vunpack.c.h.b16 %v426
        %v432 = vunpack.c.l.b16 %v427
        %v433 = vunpack.c.h.b16 %v427
        %v434 = vpack.c.b16 %v430, %v430
        %v435 = vpack.c.b16 %v431, %v431
        %v436 = vpack.c.b16 %v432, %v432
        %v437 = vpack.c.b16 %v433, %v433
        %vm442 = vcmask 519168
        %443 = vst.msk [vmem:[%s234] sm:$0xf] %vm442, %v434
        %444 = vst.msk [vmem:[%s234 + $0x4] sm:$0xf] %vm442, %v435
        %445 = vst.msk [vmem:[%s234 + $0x8] sm:$0xf] %vm442, %v436
        %446 = vst.msk [vmem:[%s234 + $0xc] sm:$0xf] %vm442, %v437
        %vm447 = vcmask 523264
        %v448 = vsel %vm447, %v422, 0.0
        %v449 = vsel %vm447, %v423, 0.0
        %v450 = vadd.f32 %v448, %v449
        %v451 = vsel %vm447, %v424, 0.0
        %v452 = vadd.f32 %v450, %v451
        %v453 = vsel %vm447, %v425, 0.0
        %v454 = vadd.f32 %v452, %v453
        %v455 = vrot.slane %v454, 4
        %v456 = vadd.f32 %v454, %v455
        %v457 = vrot.slane %v456, 2
        %v458 = vadd.f32 %v456, %v457
        %v459 = vrot.slane %v458, 1
        %v460 = vadd.f32 %v458, %v459
        %v461 = vmul.f32 %v422, %v422
        %v462 = vmul.f32 %v423, %v423
        %v463 = vmul.f32 %v424, %v424
        %v464 = vmul.f32 %v425, %v425
        %v465 = vsel %vm447, %v461, 0.0
        %v466 = vsel %vm447, %v462, 0.0
        %v467 = vadd.f32 %v465, %v466
        %v468 = vsel %vm447, %v463, 0.0
        %v469 = vadd.f32 %v467, %v468
        %v470 = vsel %vm447, %v464, 0.0
        %v471 = vadd.f32 %v469, %v470
        %v472 = vrot.slane %v471, 4
        %v473 = vadd.f32 %v471, %v472
        %v474 = vrot.slane %v473, 2
        %v475 = vadd.f32 %v473, %v474
        %v476 = vrot.slane %v475, 1
        %v477 = vadd.f32 %v475, %v476
        %479 = vrot.lane.b32.xlu0 %v477, 64
        %v480 = vpop.permute.xlu0 %479
        %v482 = vsel %vm447, %v460, %v480
        %483 = vst [vmem:[%s216] sm:$0x1] %v482
        %s484 = smul.u32 4, %s19
        %p485 = scmp.lt.s32.totalorder %s484, 15
        %s486 = scalar_select %p485, %s484, 15
        %s487 = smul.addr %s486, 4
        %s488 = scalar_lea.vmem %s3, %s487
        %s489 = sand.u32 %s126, 1
        %s490 = scalar_lea.sflag [#allocation3], %s489
        %s491 = sand.u32 %s126, 1
        %s492 = scalar_lea.vmem [#allocation2], %s491
        // Predicated region
        $region33: #{tpu_custom_call.1} parent=31 // pred_check
          %p493 = pneg %p110
        $region34: #{tpu_custom_call.1} parent=31 // pred_check_branch
          %495 = sbr.rel (%p493) target = $region36
        $region35: #{tpu_custom_call.1} parent=31 // pred_region
          %s496 = smul.u32 4, %s19
        $region36: #{tpu_custom_call.1} parent=31 // pred_fallthru
          _
        // Predicated region
        $region37: #{tpu_custom_call.1} parent=31 // pred_check
          %p497 = pneg %p136
        $region38: #{tpu_custom_call.1} parent=31 // pred_check_branch
          %499 = sbr.rel (%p497) target = $region40
        $region39: #{tpu_custom_call.1} parent=31 // pred_region
          %s501 = ssub.s32 16, 16
          %502 = vsyncadd %s490, %s501
          %s503 = smul.addr %s19, 16
          %s504 = scalar_lea.hbm %s4, %s503
          %s506 = sshll.u32 %s492, 4
          %s507 = int_to_ptr.vmem [resolvable:$true] %s506
          %509 = dma.vmem_to_hbm [thread:$0]  %s507, 16, %s504, %s490
        $region40: #{tpu_custom_call.1} parent=31 // pred_fallthru
          _
      $region32: #{tpu_custom_call.1} parent=5 // pred_fallthru
        _
      %p510 = scmp.le.s32.totalorder 2, %s14
      // Predicated region
      $region41: #{tpu_custom_call.1} parent=5 // pred_check
        %p511 = pneg %p510
      $region42: #{tpu_custom_call.1} parent=5 // pred_check_branch
        %513 = sbr.rel (%p511) target = $region44
      $region43: #{tpu_custom_call.1} parent=5 // pred_region
        %s514 = ssub.s32 %s14, 2
        // Predicated region
        $region45: #{tpu_custom_call.1} parent=43 // pred_check
          %p515 = pneg %p116
        $region46: #{tpu_custom_call.1} parent=43 // pred_check_branch
          %517 = sbr.rel (%p515) target = $region48
        $region47: #{tpu_custom_call.1} parent=43 // pred_region
          %s518 = smul.u32 4, %s20
          %p519 = scmp.lt.s32.totalorder %s518, 15
          %s520 = scalar_select %p519, %s518, 15
          %s521 = smul.addr %s520, 4
          %s522 = scalar_lea.vmem %s3, %s521
        $region48: #{tpu_custom_call.1} parent=43 // pred_fallthru
          _
        // Predicated region
        $region49: #{tpu_custom_call.1} parent=43 // pred_check
          %p523 = pneg %p142
        $region50: #{tpu_custom_call.1} parent=43 // pred_check_branch
          %525 = sbr.rel (%p523) target = $region52
        $region51: #{tpu_custom_call.1} parent=43 // pred_region
          %s526 = sand.u32 %s127, 1
          %s527 = scalar_lea.sflag [#allocation3], %s526
          %s528 = sand.u32 %s127, 1
          %s529 = scalar_lea.vmem [#allocation2], %s528
          %530 = dma.done %s527, 16
        $region52: #{tpu_custom_call.1} parent=43 // pred_fallthru
          _
      $region44: #{tpu_custom_call.1} parent=5 // pred_fallthru
        _
    $region6: #{tpu_custom_call.1} parent=1 // loop_footer
      %s18 = sadd.s32 1, %s14
    $region7: #{tpu_custom_call.1} parent=1 // loop_footer_branch
      %13 = sbr.rel target = $region3
    $region8: #{tpu_custom_call.1} parent=1 // loop_exit
      _
    %531 = vsyncpa [#allocation3], 1
    %s532 = scalar_lea.sflag [#allocation3], 1
    %533 = vsyncpa %s532, 1

</llo_original>
